<compile_context>
chip_gen: v6e
topology: v6e:2x2x1
jax: 0.10.0
libtpu: 0.0.40
codegen_flags: <defaults>
</compile_context>

<pallas_src>
import functools
import math

import jax
import jax.numpy as jnp
from jax import lax
from jax.experimental import pallas as pl
from jax.experimental.pallas import tpu as pltpu

_NUM_LANES = 128
_MASK_VALUE = -0.7 * float(jnp.finfo(jnp.float32).max)


def _round_up(n, m):
    return ((n + m - 1) // m) * m


def _sublane_gran(dtype):
    """Min sublane multiple for clean (x,128) tiling: 8 f32, 16 bf16, 32 int8."""
    return max(8, 32 // jnp.dtype(dtype).itemsize)


def _seq_tiling(s, gran):
    """Return (q_tile, kv_tile, padded_seq_len)."""
    s_min = _round_up(s, gran)
    if s_min <= 256:
        return s_min, s_min, s_min            # single tile each way
    s_pad = _round_up(s_min, 256)
    tk = 256                                  # matches 256-wide MXU on v6e/v7x
    tq = 512 if s_pad % 512 == 0 else 256     # bigger q tile => less x re-stream
    return tq, tk, s_pad


def _lane_bcast(stat, width):
    """stat: (rows, 128) with all lanes equal -> (rows, width)."""
    if width == _NUM_LANES:
        return stat
    if width < _NUM_LANES:
        return stat[:, :width]
    assert width % _NUM_LANES == 0
    return jnp.tile(stat, (1, width // _NUM_LANES))


# ---------------------------------------------------------------------------
# Fused QKV-projection + flash-attention kernel.
# Grid: (batch, q_tile, kv_tile); KV is the reduction axis (last, "arbitrary").
# ---------------------------------------------------------------------------
def _fused_attn_kernel(s_valid, s_padded,
                       xq_ref, xkv_ref, wq_ref, bq_ref, wkv_ref, bkv_ref,
                       o_ref, q_sc, m_sc, l_sc, acc_sc):
    ki = pl.program_id(2)
    dp = acc_sc.shape[-1]
    tk = xkv_ref.shape[0]

    @pl.when(ki == 0)
    def _():
        # Project Q once per (batch, q-tile).  The 1/sqrt(d_model) scale is
        # already folded into wq/bq on the host, so logits need no scaling.
        q = jnp.dot(xq_ref[...], wq_ref[...], preferred_element_type=jnp.float32)
        q = q + bq_ref[...].astype(jnp.float32)
        q_sc[...] = q.astype(q_sc.dtype)
        m_sc[...] = jnp.full(m_sc.shape, -jnp.inf, m_sc.dtype)
        l_sc[...] = jnp.zeros(l_sc.shape, l_sc.dtype)
        acc_sc[...] = jnp.zeros(acc_sc.shape, acc_sc.dtype)

    # Project K and V for this KV tile in a single MXU pass: x @ [Wk^T|Wv^T].
    kv = jnp.dot(xkv_ref[...], wkv_ref[...], preferred_element_type=jnp.float32)
    kv = kv + bkv_ref[...].astype(jnp.float32)
    k = kv[:, :dp].astype(q_sc.dtype)
    v = kv[:, dp:].astype(q_sc.dtype)

    # Transpose-free QK^T (contract the feature dim of both operands, MXU).
    s = lax.dot_general(q_sc[...], k,
                        dimension_numbers=(((1,), (1,)), ((), ())),
                        preferred_element_type=jnp.float32)        # (tq, tk)

    if s_valid != s_padded:  # static: mask KV columns that are sequence padding
        col = ki * tk + lax.broadcasted_iota(jnp.int32, s.shape, 1)
        s = jnp.where(col < s_valid, s, _MASK_VALUE)

    # Online softmax with lane-broadcast running stats (tq, 128).
    m_prev = m_sc[...]
    m_next = jnp.maximum(m_prev, jnp.max(s, axis=-1, keepdims=True))
    alpha = jnp.exp(m_prev - m_next)
    p = jnp.exp(s - _lane_bcast(m_next, s.shape[-1]))               # (tq, tk)
    l_sc[...] = alpha * l_sc[...] + jnp.sum(p, axis=-1, keepdims=True)
    acc_sc[...] = _lane_bcast(alpha, dp) * acc_sc[...] + jnp.dot(
        p.astype(v.dtype), v, preferred_element_type=jnp.float32)
    m_sc[...] = m_next

    @pl.when(ki == pl.num_programs(2) - 1)
    def _():
        inv_l = pl.reciprocal(l_sc[...], approx=True)   # EUP slot, ~free
        o_ref[...] = (acc_sc[...] * _lane_bcast(inv_l, dp)).astype(o_ref.dtype)


# ---------------------------------------------------------------------------
# Host-side wrappers
# ---------------------------------------------------------------------------
def prepare_self_attention_params(wq, bq, wk, bk, wv, bv, *, dtype=None):
    """One-time weight prep (hoisted out of the per-call path).

    w*: (d, d) torch.nn.Linear weight layout (out_features, in_features)
    b*: (d,)
    Returns (wq_p, bq_p, wkv_p, bkv_p) with the feature dim zero-padded to a
    multiple of 128, weights transposed to (in, out), the 1/sqrt(d_model)
    attention scale folded into the Q projection, and K|V concatenated so the
    kernel projects both in one MXU pass.  Pass dtype=jnp.bfloat16 on v6e/v7x
    for 2x MXU throughput.
    """
    d = wq.shape[0]
    out_dtype = jnp.dtype(dtype) if dtype is not None else jnp.asarray(wq).dtype
    dp = _round_up(d, _NUM_LANES)
    scale = 1.0 / math.sqrt(d)          # uses the ORIGINAL d_model

    def pad_w(w, s=1.0):
        w = jnp.asarray(w, jnp.float32).T * s
        return jnp.pad(w, ((0, dp - d), (0, dp - d))).astype(out_dtype)

    def pad_b(b, s=1.0):
        b = jnp.asarray(b, jnp.float32).reshape(1, d) * s
        return jnp.pad(b, ((0, 0), (0, dp - d))).astype(out_dtype)

    wq_p = pad_w(wq, scale)
    bq_p = pad_b(bq, scale)
    wkv_p = jnp.concatenate([pad_w(wk), pad_w(wv)], axis=1)   # (dp, 2*dp)
    bkv_p = jnp.concatenate([pad_b(bk), pad_b(bv)], axis=1)   # (1, 2*dp)
    return wq_p, bq_p, wkv_p, bkv_p


def self_attention_fwd(x, wq_p, bq_p, wkv_p, bkv_p):
    """Forward pass. x: (B, S, D); params from prepare_self_attention_params."""
    B, S, D = x.shape
    Dp = wq_p.shape[0]
    cdt = wq_p.dtype                           # compute/IO dtype inside kernel
    tq, tk, s_pad = _seq_tiling(S, _sublane_gran(cdt))

    xp = x
    if s_pad != S or Dp != D:
        xp = jnp.pad(x, ((0, 0), (0, s_pad - S), (0, Dp - D)))
    xp = xp.astype(cdt)

    grid = (B, s_pad // tq, s_pad // tk)

    xq_spec = pl.BlockSpec((None, tq, Dp), lambda b, qi, ki: (b, qi, 0))
    xkv_spec = pl.BlockSpec((None, tk, Dp), lambda b, qi, ki: (b, ki, 0))
    # Grid-invariant operands (fetched once).  For very large d_model, use
    # pipeline_mode=pl.Buffered(1) or a column-tiling grid axis here.
    wq_spec = pl.BlockSpec((Dp, Dp), lambda b, qi, ki: (0, 0))
    bq_spec = pl.BlockSpec((1, Dp), lambda b, qi, ki: (0, 0))
    wkv_spec = pl.BlockSpec((Dp, 2 * Dp), lambda b, qi, ki: (0, 0))
    bkv_spec = pl.BlockSpec((1, 2 * Dp), lambda b, qi, ki: (0, 0))
    o_spec = pl.BlockSpec((None, tq, Dp), lambda b, qi, ki: (b, qi, 0))

    out = pl.pallas_call(
        functools.partial(_fused_attn_kernel, S, s_pad),
        out_shape=jax.ShapeDtypeStruct((B, s_pad, Dp), cdt),
        grid_spec=pltpu.PrefetchScalarGridSpec(
            num_scalar_prefetch=0,
            grid=grid,
            in_specs=[xq_spec, xkv_spec, wq_spec, bq_spec, wkv_spec, bkv_spec],
            out_specs=o_spec,
            scratch_shapes=[
                pltpu.VMEM((tq, Dp), cdt),                   # projected Q tile
                pltpu.VMEM((tq, _NUM_LANES), jnp.float32),   # running max (lane-bcast)
                pltpu.VMEM((tq, _NUM_LANES), jnp.float32),   # running denom (lane-bcast)
                pltpu.VMEM((tq, Dp), jnp.float32),           # output accumulator
            ],
        ),
        compiler_params=pltpu.CompilerParams(
            # batch x q-tile are independent -> megacore-shardable; the KV
            # reduction axis is last and "arbitrary".  VMEM use is ~3 MiB so
            # the default per-generation scoped limit is plenty.
            dimension_semantics=("parallel", "parallel", "arbitrary"),
        ),
    )(xp, xp, wq_p, bq_p, wkv_p, bkv_p)

    if s_pad != S or Dp != D:
        out = out[:, :S, :D]
    return out.astype(x.dtype)


def self_attention(x, wq, bq, wk, bk, wv, bv):
    """Convenience wrapper matching torch SelfAttention.forward's parameters."""
    params = prepare_self_attention_params(wq, bq, wk, bk, wv, bv)
    return self_attention_fwd(x, *params)


# ---------------------------------------------------------------------------
# Reference + test harness
# ---------------------------------------------------------------------------
def _reference(x, wq, bq, wk, bk, wv, bv):
    d = x.shape[-1]
    q = x @ wq.T + bq
    k = x @ wk.T + bk
    v = x @ wv.T + bv
    logits = jnp.einsum("bqd,bkd->bqk", q, k) / math.sqrt(d)
    return jnp.einsum("bqk,bkd->bqd", jax.nn.softmax(logits, axis=-1), v)


def _make_params(key, d):
    bound = 1.0 / math.sqrt(d)
    ks = jax.random.split(key, 6)
    wq = jax.random.uniform(ks[0], (d, d), jnp.float32, -bound, bound)
    wk = jax.random.uniform(ks[1], (d, d), jnp.float32, -bound, bound)
    wv = jax.random.uniform(ks[2], (d, d), jnp.float32, -bound, bound)
    bq = jax.random.uniform(ks[3], (d,), jnp.float32, -bound, bound)
    bk = jax.random.uniform(ks[4], (d,), jnp.float32, -bound, bound)
    bv = jax.random.uniform(ks[5], (d,), jnp.float32, -bound, bound)
    return wq, bq, wk, bk, wv, bv


if __name__ == "__main__":
    D = 32  # d_model
    key = jax.random.PRNGKey(0)
    kparam, kx1, kx2 = jax.random.split(key, 3)
    raw_params = _make_params(kparam, D)

    # Weight prep (transpose / pad / scale-fold / concat) happens exactly once.
    params = prepare_self_attention_params(*raw_params)
    fwd = jax.jit(self_attention_fwd)

    # Small shape implied by the module (batch=2, seq=8, d_model=32).
    x_small = jax.random.normal(kx1, (2, 8, D), dtype=jnp.float32)
    out_small = jax.block_until_ready(fwd(x_small, *params))
    ref_small = _reference(x_small, *raw_params)
    assert out_small.shape == x_small.shape
    assert jnp.allclose(out_small, ref_small, atol=5e-3, rtol=5e-3), \
        "mismatch vs JAX reference (small)"

    # Longer, non-divisible sequence: exercises multi-KV-tile online softmax,
    # sequence padding and the masked last KV tile.
    x_long = jax.random.normal(kx2, (2, 320, D), dtype=jnp.float32)
    out_long = jax.block_until_ready(fwd(x_long, *params))
    ref_long = _reference(x_long, *raw_params)
    assert out_long.shape == x_long.shape
    assert jnp.allclose(out_long, ref_long, atol=5e-3, rtol=5e-3), \
        "mismatch vs JAX reference (long/padded)"

    print("KERNEL_OK")
</pallas_src>

<mosaic_0001>
module attributes {stable_mosaic.version = 11 : i64} {
  func.func @_fused_attn_kernel(%arg0: i32, %arg1: i32, %arg2: i32, %arg3: memref<1x8x128xf32, #tpu.memory_space<vmem>>, %arg4: memref<1x8x128xf32, #tpu.memory_space<vmem>>, %arg5: memref<128x128xf32, #tpu.memory_space<vmem>>, %arg6: memref<1x128xf32, #tpu.memory_space<vmem>>, %arg7: memref<128x256xf32, #tpu.memory_space<vmem>>, %arg8: memref<1x256xf32, #tpu.memory_space<vmem>>, %arg9: memref<1x8x128xf32, #tpu.memory_space<vmem>>, %arg10: memref<8x128xf32, #tpu.memory_space<vmem>>, %arg11: memref<8x128xf32, #tpu.memory_space<vmem>>, %arg12: memref<8x128xf32, #tpu.memory_space<vmem>>, %arg13: memref<8x128xf32, #tpu.memory_space<vmem>>) attributes {dimension_semantics = [#tpu.dimension_semantics<parallel>, #tpu.dimension_semantics<parallel>, #tpu.dimension_semantics<arbitrary>], iteration_bounds = array<i64: 2, 1, 1>, scalar_prefetch = 0 : i64, scratch_operands = 4 : i64, tpu.core_type = #tpu.core_type<tc>, window_params = [{transform_indices = @transform_0, window_bounds = array<i64: 1, 8, 128>}, {transform_indices = @transform_1, window_bounds = array<i64: 1, 8, 128>}, {pipeline_mode = #tpu.pipeline_mode<synchronous>, transform_indices = @transform_2, window_bounds = array<i64: 128, 128>}, {pipeline_mode = #tpu.pipeline_mode<synchronous>, transform_indices = @transform_3, window_bounds = array<i64: 1, 128>}, {pipeline_mode = #tpu.pipeline_mode<synchronous>, transform_indices = @transform_4, window_bounds = array<i64: 128, 256>}, {pipeline_mode = #tpu.pipeline_mode<synchronous>, transform_indices = @transform_5, window_bounds = array<i64: 1, 256>}, {transform_indices = @transform_6, window_bounds = array<i64: 1, 8, 128>}]} {
    %c0_i32 = arith.constant 0 : i32
    %0 = arith.cmpi eq, %arg2, %c0_i32 : i32
    %1 = arith.extui %0 : i1 to i32
    %c0_i32_0 = arith.constant 0 : i32
    %2 = arith.cmpi ne, %1, %c0_i32_0 : i32
    scf.if %2 {
      %c0_27 = arith.constant 0 : index
      %c0_28 = arith.constant 0 : index
      %c0_29 = arith.constant 0 : index
      %40 = vector.load %arg3[%c0_27, %c0_28, %c0_29] : memref<1x8x128xf32, #tpu.memory_space<vmem>>, vector<1x8x128xf32>
      %41 = vector.shape_cast %40 : vector<1x8x128xf32> to vector<8x128xf32>
      %c0_30 = arith.constant 0 : index
      %c0_31 = arith.constant 0 : index
      %42 = vector.load %arg5[%c0_30, %c0_31] : memref<128x128xf32, #tpu.memory_space<vmem>>, vector<128x128xf32>
      %cst_32 = arith.constant dense<0.000000e+00> : vector<8x128xf32>
      %43 = tpu.matmul %41, %42, %cst_32 {dimension_numbers = #tpu.dot_dimension_numbers<[1], [0], [0], [1], [0, 0, 1, 1], [], []>} : vector<8x128xf32>, vector<128x128xf32>, vector<8x128xf32> -> vector<8x128xf32>
      %c0_33 = arith.constant 0 : index
      %c0_34 = arith.constant 0 : index
      %44 = vector.load %arg6[%c0_33, %c0_34] : memref<1x128xf32, #tpu.memory_space<vmem>>, vector<1x128xf32>
      %45 = vector.broadcast %44 : vector<1x128xf32> to vector<8x128xf32>
      %46 = arith.addf %43, %45 : vector<8x128xf32>
      %c0_35 = arith.constant 0 : index
      %c0_36 = arith.constant 0 : index
      %47 = vector.load %arg10[%c0_35, %c0_36] : memref<8x128xf32, #tpu.memory_space<vmem>>, vector<8x128xf32>
      tpu.vector_store %arg10[%c0_35, %c0_36], %46 {strides = array<i32>} : memref<8x128xf32, #tpu.memory_space<vmem>>, vector<8x128xf32>,
      %cst_37 = arith.constant 0xFF800000 : f32
      %48 = vector.broadcast %cst_37 : f32 to vector<8x128xf32>
      %c0_38 = arith.constant 0 : index
      %c0_39 = arith.constant 0 : index
      %49 = vector.load %arg11[%c0_38, %c0_39] : memref<8x128xf32, #tpu.memory_space<vmem>>, vector<8x128xf32>
      tpu.vector_store %arg11[%c0_38, %c0_39], %48 {strides = array<i32>} : memref<8x128xf32, #tpu.memory_space<vmem>>, vector<8x128xf32>,
      %cst_40 = arith.constant 0.000000e+00 : f32
      %50 = vector.broadcast %cst_40 : f32 to vector<8x128xf32>
      %c0_41 = arith.constant 0 : index
      %c0_42 = arith.constant 0 : index
      %51 = vector.load %arg12[%c0_41, %c0_42] : memref<8x128xf32, #tpu.memory_space<vmem>>, vector<8x128xf32>
      tpu.vector_store %arg12[%c0_41, %c0_42], %50 {strides = array<i32>} : memref<8x128xf32, #tpu.memory_space<vmem>>, vector<8x128xf32>,
      %cst_43 = arith.constant 0.000000e+00 : f32
      %52 = vector.broadcast %cst_43 : f32 to vector<8x128xf32>
      %c0_44 = arith.constant 0 : index
      %c0_45 = arith.constant 0 : index
      %53 = vector.load %arg13[%c0_44, %c0_45] : memref<8x128xf32, #tpu.memory_space<vmem>>, vector<8x128xf32>
      tpu.vector_store %arg13[%c0_44, %c0_45], %52 {strides = array<i32>} : memref<8x128xf32, #tpu.memory_space<vmem>>, vector<8x128xf32>,
    } else {
    }
    %c0 = arith.constant 0 : index
    %c0_1 = arith.constant 0 : index
    %c0_2 = arith.constant 0 : index
    %3 = vector.load %arg4[%c0, %c0_1, %c0_2] : memref<1x8x128xf32, #tpu.memory_space<vmem>>, vector<1x8x128xf32>
    %4 = vector.shape_cast %3 : vector<1x8x128xf32> to vector<8x128xf32>
    %c0_3 = arith.constant 0 : index
    %c0_4 = arith.constant 0 : index
    %5 = vector.load %arg7[%c0_3, %c0_4] : memref<128x256xf32, #tpu.memory_space<vmem>>, vector<128x256xf32>
    %cst = arith.constant dense<0.000000e+00> : vector<8x256xf32>
    %6 = tpu.matmul %4, %5, %cst {dimension_numbers = #tpu.dot_dimension_numbers<[1], [0], [0], [1], [0, 0, 1, 1], [], []>} : vector<8x128xf32>, vector<128x256xf32>, vector<8x256xf32> -> vector<8x256xf32>
    %c0_5 = arith.constant 0 : index
    %c0_6 = arith.constant 0 : index
    %7 = vector.load %arg8[%c0_5, %c0_6] : memref<1x256xf32, #tpu.memory_space<vmem>>, vector<1x256xf32>
    %8 = vector.broadcast %7 : vector<1x256xf32> to vector<8x256xf32>
    %9 = arith.addf %6, %8 : vector<8x256xf32>
    %10 = vector.extract_strided_slice %9 {offsets = [0, 0], sizes = [8, 128], strides = [1, 1]} : vector<8x256xf32> to vector<8x128xf32>
    %11 = vector.extract_strided_slice %9 {offsets = [0, 128], sizes = [8, 128], strides = [1, 1]} : vector<8x256xf32> to vector<8x128xf32>
    %c0_7 = arith.constant 0 : index
    %c0_8 = arith.constant 0 : index
    %12 = vector.load %arg10[%c0_7, %c0_8] : memref<8x128xf32, #tpu.memory_space<vmem>>, vector<8x128xf32>
    %cst_9 = arith.constant dense<0.000000e+00> : vector<8x8xf32>
    %13 = tpu.matmul %12, %10, %cst_9 {dimension_numbers = #tpu.dot_dimension_numbers<[1], [1], [0], [0], [0, 0, 1, 0], [], []>} : vector<8x128xf32>, vector<8x128xf32>, vector<8x8xf32> -> vector<8x8xf32>
    %c0_10 = arith.constant 0 : index
    %c0_11 = arith.constant 0 : index
    %14 = vector.load %arg11[%c0_10, %c0_11] : memref<8x128xf32, #tpu.memory_space<vmem>>, vector<8x128xf32>
    %cst_12 = arith.constant dense<0xFF800000> : vector<8xf32>
    %15 = vector.multi_reduction <maximumf>, %13, %cst_12 [1] : vector<8x8xf32> to vector<8xf32>
    %16 = vector.shape_cast %15 : vector<8xf32> to vector<8x1xf32>
    %17 = vector.broadcast %16 : vector<8x1xf32> to vector<8x128xf32>
    %18 = arith.maximumf %14, %17 : vector<8x128xf32>
    %19 = arith.subf %14, %18 : vector<8x128xf32>
    %20 = math.exp %19 : vector<8x128xf32>
    %21 = vector.extract_strided_slice %18 {offsets = [0, 0], sizes = [8, 8], strides = [1, 1]} : vector<8x128xf32> to vector<8x8xf32>
    %22 = arith.subf %13, %21 : vector<8x8xf32>
    %23 = math.exp %22 : vector<8x8xf32>
    %c0_13 = arith.constant 0 : index
    %c0_14 = arith.constant 0 : index
    %24 = vector.load %arg12[%c0_13, %c0_14] : memref<8x128xf32, #tpu.memory_space<vmem>>, vector<8x128xf32>
    %25 = arith.mulf %20, %24 : vector<8x128xf32>
    %cst_15 = arith.constant dense<0.000000e+00> : vector<8xf32>
    %26 = vector.multi_reduction <add>, %23, %cst_15 [1] : vector<8x8xf32> to vector<8xf32>
    %27 = vector.shape_cast %26 : vector<8xf32> to vector<8x1xf32>
    %28 = vector.broadcast %27 : vector<8x1xf32> to vector<8x128xf32>
    %29 = arith.addf %25, %28 : vector<8x128xf32>
    %c0_16 = arith.constant 0 : index
    %c0_17 = arith.constant 0 : index
    %30 = vector.load %arg12[%c0_16, %c0_17] : memref<8x128xf32, #tpu.memory_space<vmem>>, vector<8x128xf32>
    tpu.vector_store %arg12[%c0_16, %c0_17], %29 {strides = array<i32>} : memref<8x128xf32, #tpu.memory_space<vmem>>, vector<8x128xf32>,
    %c0_18 = arith.constant 0 : index
    %c0_19 = arith.constant 0 : index
    %31 = vector.load %arg13[%c0_18, %c0_19] : memref<8x128xf32, #tpu.memory_space<vmem>>, vector<8x128xf32>
    %32 = arith.mulf %20, %31 : vector<8x128xf32>
    %cst_20 = arith.constant dense<0.000000e+00> : vector<8x128xf32>
    %33 = tpu.matmul %23, %11, %cst_20 {dimension_numbers = #tpu.dot_dimension_numbers<[1], [0], [0], [1], [0, 0, 1, 1], [], []>} : vector<8x8xf32>, vector<8x128xf32>, vector<8x128xf32> -> vector<8x128xf32>
    %34 = arith.addf %32, %33 : vector<8x128xf32>
    %c0_21 = arith.constant 0 : index
    %c0_22 = arith.constant 0 : index
    %35 = vector.load %arg13[%c0_21, %c0_22] : memref<8x128xf32, #tpu.memory_space<vmem>>, vector<8x128xf32>
    tpu.vector_store %arg13[%c0_21, %c0_22], %34 {strides = array<i32>} : memref<8x128xf32, #tpu.memory_space<vmem>>, vector<8x128xf32>,
    %c0_23 = arith.constant 0 : index
    %c0_24 = arith.constant 0 : index
    %36 = vector.load %arg11[%c0_23, %c0_24] : memref<8x128xf32, #tpu.memory_space<vmem>>, vector<8x128xf32>
    tpu.vector_store %arg11[%c0_23, %c0_24], %18 {strides = array<i32>} : memref<8x128xf32, #tpu.memory_space<vmem>>, vector<8x128xf32>,
    %c0_i32_25 = arith.constant 0 : i32
    %37 = arith.cmpi eq, %arg2, %c0_i32_25 : i32
    %38 = arith.extui %37 : i1 to i32
    %c0_i32_26 = arith.constant 0 : i32
    %39 = arith.cmpi ne, %38, %c0_i32_26 : i32
    scf.if %39 {
      %c0_27 = arith.constant 0 : index
      %c0_28 = arith.constant 0 : index
      %40 = vector.load %arg12[%c0_27, %c0_28] : memref<8x128xf32, #tpu.memory_space<vmem>>, vector<8x128xf32>
      %41 = tpu.reciprocal %40 {approx = true} : vector<8x128xf32> -> vector<8x128xf32>
      %c0_29 = arith.constant 0 : index
      %c0_30 = arith.constant 0 : index
      %42 = vector.load %arg13[%c0_29, %c0_30] : memref<8x128xf32, #tpu.memory_space<vmem>>, vector<8x128xf32>
      %43 = arith.mulf %42, %41 : vector<8x128xf32>
      %c0_31 = arith.constant 0 : index
      %c0_32 = arith.constant 0 : index
      %c0_33 = arith.constant 0 : index
      %44 = vector.load %arg9[%c0_31, %c0_32, %c0_33] : memref<1x8x128xf32, #tpu.memory_space<vmem>>, vector<1x8x128xf32>
      %45 = vector.shape_cast %44 : vector<1x8x128xf32> to vector<8x128xf32>
      %46 = vector.shape_cast %43 : vector<8x128xf32> to vector<1x8x128xf32>
      tpu.vector_store %arg9[%c0_31, %c0_32, %c0_33], %46 {strides = array<i32>} : memref<1x8x128xf32, #tpu.memory_space<vmem>>, vector<1x8x128xf32>,
    } else {
    }
    return
  }
  func.func @transform_0(%arg0: i32, %arg1: i32, %arg2: i32) -> (i32, i32, i32) {
    %c0_i32 = arith.constant 0 : i32
    %c0_i32_0 = arith.constant 0 : i32
    return %arg0, %arg1, %c0_i32 : i32, i32, i32
  }
  func.func @transform_1(%arg0: i32, %arg1: i32, %arg2: i32) -> (i32, i32, i32) {
    %c0_i32 = arith.constant 0 : i32
    %c0_i32_0 = arith.constant 0 : i32
    return %arg0, %arg2, %c0_i32 : i32, i32, i32
  }
  func.func @transform_2(%arg0: i32, %arg1: i32, %arg2: i32) -> (i32, i32) {
    %c0_i32 = arith.constant 0 : i32
    %c0_i32_0 = arith.constant 0 : i32
    %c0_i32_1 = arith.constant 0 : i32
    return %c0_i32, %c0_i32_0 : i32, i32
  }
  func.func @transform_3(%arg0: i32, %arg1: i32, %arg2: i32) -> (i32, i32) {
    %c0_i32 = arith.constant 0 : i32
    %c0_i32_0 = arith.constant 0 : i32
    %c0_i32_1 = arith.constant 0 : i32
    return %c0_i32, %c0_i32_0 : i32, i32
  }
  func.func @transform_4(%arg0: i32, %arg1: i32, %arg2: i32) -> (i32, i32) {
    %c0_i32 = arith.constant 0 : i32
    %c0_i32_0 = arith.constant 0 : i32
    %c0_i32_1 = arith.constant 0 : i32
    return %c0_i32, %c0_i32_0 : i32, i32
  }
  func.func @transform_5(%arg0: i32, %arg1: i32, %arg2: i32) -> (i32, i32) {
    %c0_i32 = arith.constant 0 : i32
    %c0_i32_0 = arith.constant 0 : i32
    %c0_i32_1 = arith.constant 0 : i32
    return %c0_i32, %c0_i32_0 : i32, i32
  }
  func.func @transform_6(%arg0: i32, %arg1: i32, %arg2: i32) -> (i32, i32, i32) {
    %c0_i32 = arith.constant 0 : i32
    %c0_i32_0 = arith.constant 0 : i32
    return %arg0, %arg1, %c0_i32 : i32, i32, i32
  }
}

</mosaic_0001>

<llo_original>
// kernel: self_attention_fwd.1
$region0: #{self_attention_fwd.1}
  #allocation0 [shape = 'u32[]', space=smem, size = 0x4, offset = 0x4, fixed_abs, tag = 'smem constant byte address 0x4 - core index']
  #allocation1 [shape = 'u32[144,128]{1,0:T(1,128)}', space=vmem, size = 0x12000, scoped, tag = 'internal scratch']
  #allocation2 [shape = 'f32[8,128]{1,0:T(8,128)}', space=vmem, size = 0x1000, scoped, tag = 'scratch operand']
  #allocation3 [shape = 'f32[8,128]{1,0:T(8,128)}', space=vmem, size = 0x1000, scoped, tag = 'scratch operand']
  #allocation4 [shape = 'f32[8,128]{1,0:T(8,128)}', space=vmem, size = 0x1000, scoped, tag = 'scratch operand']
  #allocation5 [shape = 'f32[8,128]{1,0:T(8,128)}', space=vmem, size = 0x1000, scoped, tag = 'scratch operand']
  %s0 = inlined_call_operand.vmem [shape: f32[2,8,128], index: 0, kind: input, shape index: {}, may-alias: {0,1}]
  %s1 = inlined_call_operand.vmem [shape: f32[2,8,128], index: 1, kind: input, shape index: {}, may-alias: {0,1}]
  %s2 = inlined_call_operand.hbm [shape: f32[128,128], index: 2, kind: input, shape index: {}]
  %s3 = inlined_call_operand.vmem [shape: f32[1,128], index: 3, kind: input, shape index: {}]
  %s4 = inlined_call_operand.hbm [shape: f32[128,256], index: 4, kind: input, shape index: {}]
  %s5 = inlined_call_operand.vmem [shape: f32[1,256], index: 5, kind: input, shape index: {}]
  %s6 = inlined_call_operand.hbm [shape: f32[2,8,128], index: 6, kind: output, shape index: {}]
  %s7 = sld [smem:[#allocation0]]
  $region73: #{self_attention_fwd.1} parent=0
    _
  %s9 = ssub.s32 1, %s7
  %s10 = scalar_select 0, %s9, %s7
  $region1: #{self_attention_fwd.1} parent=0
    #allocation6 [shape = 'u8[65536]{0}', space=vmem, size = 0x10000, scoped, tag = 'input window, operand 2, single buffered']
    #allocation7 [shape = 's32[2]{0}', space=sflag, size = 0x8, scoped, tag = 'scoped memory for self_attention_fwd.1']
    #allocation8 [shape = 's32[2]{0}', space=sflag, size = 0x8, scoped, tag = 'scoped memory for self_attention_fwd.1']
    #allocation9 [shape = 'u8[131072]{0}', space=vmem, size = 0x20000, scoped, tag = 'input window, operand 4, single buffered']
    #allocation10 [shape = 's32[1]{0}', space=sflag, size = 0x4, scoped, tag = 'scoped memory for self_attention_fwd.1']
    #allocation11 [shape = 'u8[8192]{0}', space=vmem, size = 0x2000, scoped, tag = 'output window, operand 0']
    %11 = vsyncpa [#allocation7], 0
    %12 = vsyncpa [#allocation10], 0
    %13 = vsyncpa [#allocation8], 0
    %s14 = scalar_lea.sflag [#allocation8], 1
    %15 = vsyncpa %s14, 0
    loop: start=0, step=1, limit=4
    $region2: #{self_attention_fwd.1} parent=1 // loop_pre_header
      _
    $region3: #{self_attention_fwd.1} parent=1 // loop_header
      %s17 = sphi 0, %s21
      %p18 = scmp.ge.s32.totalorder %s17, 4
      %s24 = sphi 0, %s43
      %s25 = sphi 0, %s39
      %s26 = sphi 0, %s35
      %s27 = sphi 0, %s24
      %s28 = sphi 0, %s25
      %s29 = sphi 0, %s26
      %s30 = sphi 0, %s27
      %s31 = sphi 0, %s28
      %s32 = sphi 0, %s29
      %s48 = sphi 0, %s50
      %s51 = sphi 0, %s48
      %s52 = sphi 0, %s51
      %s68 = sphi 0, %s52
      %s76 = sphi 0, %s78
      %s79 = sphi 0, %s76
      %s80 = sphi 0, %s79
      %s96 = sphi 0, %s80
      %s100 = sphi 0, %s100
      %s102 = sphi 0, %s100
      %s103 = sphi 0, %s102
      %s117 = sphi 0, %s103
      %s121 = sphi 0, %s121
      %s123 = sphi 0, %s121
      %s124 = sphi 0, %s123
      %s138 = sphi 0, %s124
      %s142 = sphi 0, %s142
      %s144 = sphi 0, %s142
      %s145 = sphi 0, %s144
      %s159 = sphi 0, %s145
      %s163 = sphi 0, %s163
      %s165 = sphi 0, %s163
      %s166 = sphi 0, %s165
      %s180 = sphi 0, %s166
      %s188 = sphi 0, %s190
      %s191 = sphi 0, %s188
      %s192 = sphi 0, %s191
      %s208 = sphi 0, %s192
    $region4: #{self_attention_fwd.1} parent=1 // loop_header_branch
      %20 = sbr.rel (%p18) target = $region8
    $region5: #{self_attention_fwd.1} parent=1 // loop_body
      %s22 = ssub.s32 %s17, 1
      %s23 = ssub.s32 %s17, 2
      %s33 = sadd.s32 1, %s26
      %p34 = scmp.ge.s32.totalorder %s33, 1
      %s35 = scalar_select %p34, 0, %s33
      %s36 = sadd.s32 1, %s25
      %s37 = scalar_select %p34, %s36, %s25
      %p38 = scmp.ge.s32.totalorder %s37, 1
      %s39 = scalar_select %p38, 0, %s37
      %s40 = sadd.s32 1, %s24
      %s41 = scalar_select %p38, %s40, %s24
      %p42 = scmp.ge.s32.totalorder %s41, 2
      %s43 = scalar_select %p42, 0, %s41
      %s44 = ssub.s32 %s24, %s43
      %s45 = ssub.s32 %s25, %s39
      %s46 = sor.u32 %s44, %s45
      %p47 = scmp.eq.s32.totalorder %s46, 0
      %s49 = sadd.s32 %s48, 1
      %s50 = scalar_select %p47, %s48, %s49
      %p53 = pneg %p47
      %p54 = scmp.eq.s32.totalorder %s17, 1
      %p55 = por %p53, %p54
      %p56 = scmp.ne.s32.totalorder %s48, %s51
      %p57 = scmp.eq.s32.totalorder %s17, 0
      %p58 = por %p56, %p57
      %p59 = scmp.ne.s32.totalorder %s48, %s51
      %p60 = scmp.eq.s32.totalorder %s22, 1
      %p61 = por %p59, %p60
      %p62 = scmp.ne.s32.totalorder %s51, %s52
      %p63 = scmp.eq.s32.totalorder %s22, 0
      %p64 = por %p62, %p63
      %p65 = scmp.ne.s32.totalorder %s51, %s52
      %p66 = scmp.eq.s32.totalorder %s23, 1
      %p67 = por %p65, %p66
      %p69 = scmp.ne.s32.totalorder %s52, %s68
      %p70 = scmp.eq.s32.totalorder %s23, 0
      %p71 = por %p69, %p70
      %s72 = ssub.s32 %s24, %s43
      %s73 = ssub.s32 %s26, %s35
      %s74 = sor.u32 %s72, %s73
      %p75 = scmp.eq.s32.totalorder %s74, 0
      %s77 = sadd.s32 %s76, 1
      %s78 = scalar_select %p75, %s76, %s77
      %p81 = pneg %p75
      %p82 = scmp.eq.s32.totalorder %s17, 1
      %p83 = por %p81, %p82
      %p84 = scmp.ne.s32.totalorder %s76, %s79
      %p85 = scmp.eq.s32.totalorder %s17, 0
      %p86 = por %p84, %p85
      %p87 = scmp.ne.s32.totalorder %s76, %s79
      %p88 = scmp.eq.s32.totalorder %s22, 1
      %p89 = por %p87, %p88
      %p90 = scmp.ne.s32.totalorder %s79, %s80
      %p91 = scmp.eq.s32.totalorder %s22, 0
      %p92 = por %p90, %p91
      %p93 = scmp.ne.s32.totalorder %s79, %s80
      %p94 = scmp.eq.s32.totalorder %s23, 1
      %p95 = por %p93, %p94
      %p97 = scmp.ne.s32.totalorder %s80, %s96
      %p98 = scmp.eq.s32.totalorder %s23, 0
      %p99 = por %p97, %p98
      %s101 = sadd.s32 %s100, 1
      %p104 = scmp.eq.s32.totalorder %s17, 1
      %p105 = scmp.ne.s32.totalorder %s100, %s102
      %p106 = scmp.eq.s32.totalorder %s17, 0
      %p107 = por %p105, %p106
      %p108 = scmp.ne.s32.totalorder %s100, %s102
      %p109 = scmp.eq.s32.totalorder %s22, 1
      %p110 = por %p108, %p109
      %p111 = scmp.ne.s32.totalorder %s102, %s103
      %p112 = scmp.eq.s32.totalorder %s22, 0
      %p113 = por %p111, %p112
      %p114 = scmp.ne.s32.totalorder %s102, %s103
      %p115 = scmp.eq.s32.totalorder %s23, 1
      %p116 = por %p114, %p115
      %p118 = scmp.ne.s32.totalorder %s103, %s117
      %p119 = scmp.eq.s32.totalorder %s23, 0
      %p120 = por %p118, %p119
      %s122 = sadd.s32 %s121, 1
      %p125 = scmp.eq.s32.totalorder %s17, 1
      %p126 = scmp.ne.s32.totalorder %s121, %s123
      %p127 = scmp.eq.s32.totalorder %s17, 0
      %p128 = por %p126, %p127
      %p129 = scmp.ne.s32.totalorder %s121, %s123
      %p130 = scmp.eq.s32.totalorder %s22, 1
      %p131 = por %p129, %p130
      %p132 = scmp.ne.s32.totalorder %s123, %s124
      %p133 = scmp.eq.s32.totalorder %s22, 0
      %p134 = por %p132, %p133
      %p135 = scmp.ne.s32.totalorder %s123, %s124
      %p136 = scmp.eq.s32.totalorder %s23, 1
      %p137 = por %p135, %p136
      %p139 = scmp.ne.s32.totalorder %s124, %s138
      %p140 = scmp.eq.s32.totalorder %s23, 0
      %p141 = por %p139, %p140
      %s143 = sadd.s32 %s142, 1
      %p146 = scmp.eq.s32.totalorder %s17, 1
      %p147 = scmp.ne.s32.totalorder %s142, %s144
      %p148 = scmp.eq.s32.totalorder %s17, 0
      %p149 = por %p147, %p148
      %p150 = scmp.ne.s32.totalorder %s142, %s144
      %p151 = scmp.eq.s32.totalorder %s22, 1
      %p152 = por %p150, %p151
      %p153 = scmp.ne.s32.totalorder %s144, %s145
      %p154 = scmp.eq.s32.totalorder %s22, 0
      %p155 = por %p153, %p154
      %p156 = scmp.ne.s32.totalorder %s144, %s145
      %p157 = scmp.eq.s32.totalorder %s23, 1
      %p158 = por %p156, %p157
      %p160 = scmp.ne.s32.totalorder %s145, %s159
      %p161 = scmp.eq.s32.totalorder %s23, 0
      %p162 = por %p160, %p161
      %s164 = sadd.s32 %s163, 1
      %p167 = scmp.eq.s32.totalorder %s17, 1
      %p168 = scmp.ne.s32.totalorder %s163, %s165
      %p169 = scmp.eq.s32.totalorder %s17, 0
      %p170 = por %p168, %p169
      %p171 = scmp.ne.s32.totalorder %s163, %s165
      %p172 = scmp.eq.s32.totalorder %s22, 1
      %p173 = por %p171, %p172
      %p174 = scmp.ne.s32.totalorder %s165, %s166
      %p175 = scmp.eq.s32.totalorder %s22, 0
      %p176 = por %p174, %p175
      %p177 = scmp.ne.s32.totalorder %s165, %s166
      %p178 = scmp.eq.s32.totalorder %s23, 1
      %p179 = por %p177, %p178
      %p181 = scmp.ne.s32.totalorder %s166, %s180
      %p182 = scmp.eq.s32.totalorder %s23, 0
      %p183 = por %p181, %p182
      %s184 = ssub.s32 %s24, %s43
      %s185 = ssub.s32 %s25, %s39
      %s186 = sor.u32 %s184, %s185
      %p187 = scmp.eq.s32.totalorder %s186, 0
      %s189 = sadd.s32 %s188, 1
      %s190 = scalar_select %p187, %s188, %s189
      %p193 = pneg %p187
      %p194 = scmp.eq.s32.totalorder %s17, 1
      %p195 = por %p193, %p194
      %p196 = scmp.ne.s32.totalorder %s188, %s191
      %p197 = scmp.eq.s32.totalorder %s17, 0
      %p198 = por %p196, %p197
      %p199 = scmp.ne.s32.totalorder %s188, %s191
      %p200 = scmp.eq.s32.totalorder %s22, 1
      %p201 = por %p199, %p200
      %p202 = scmp.ne.s32.totalorder %s191, %s192
      %p203 = scmp.eq.s32.totalorder %s22, 0
      %p204 = por %p202, %p203
      %p205 = scmp.ne.s32.totalorder %s191, %s192
      %p206 = scmp.eq.s32.totalorder %s23, 1
      %p207 = por %p205, %p206
      %p209 = scmp.ne.s32.totalorder %s192, %s208
      %p210 = scmp.eq.s32.totalorder %s23, 0
      %p211 = por %p209, %p210
      %p212 = scmp.le.s32.totalorder 1, %s17
      %p213 = scmp.lt.s32.totalorder %s17, 3
      %p214 = pnand %p212, %p213
      %p215 = pneg %p214
      // Predicated region
      $region9: #{self_attention_fwd.1} parent=5 // pred_check
        _
      $region10: #{self_attention_fwd.1} parent=5 // pred_check_branch
        %217 = sbr.rel (%p214) target = $region12
      $region11: #{self_attention_fwd.1} parent=5 // pred_region
        %s218 = ssub.s32 %s17, 1
        // Predicated region
        $region13: #{self_attention_fwd.1} parent=11 // pred_check
          %p219 = pneg %p113
        $region14: #{self_attention_fwd.1} parent=11 // pred_check_branch
          %221 = sbr.rel (%p219) target = $region16
        $region15: #{self_attention_fwd.1} parent=11 // pred_region
          %s223 = ssub.s32 2048, 2048
          %224 = vsyncadd [#allocation7], %s223
          %s225 = sshll.u32 [#allocation6], 4
          %s226 = int_to_ptr.vmem [resolvable:$true] %s225
          %231 = dma.hbm_to_vmem [thread:$0]  %s2, 2048, %s226, [#allocation7], 128, 128, 8
        $region16: #{self_attention_fwd.1} parent=11 // pred_fallthru
          _
        // Predicated region
        $region17: #{self_attention_fwd.1} parent=11 // pred_check
          %p232 = pneg %p134
        $region18: #{self_attention_fwd.1} parent=11 // pred_check_branch
          %234 = sbr.rel (%p232) target = $region20
        $region19: #{self_attention_fwd.1} parent=11 // pred_region
          _
        $region20: #{self_attention_fwd.1} parent=11 // pred_fallthru
          _
        // Predicated region
        $region21: #{self_attention_fwd.1} parent=11 // pred_check
          %p235 = pneg %p155
        $region22: #{self_attention_fwd.1} parent=11 // pred_check_branch
          %237 = sbr.rel (%p235) target = $region24
        $region23: #{self_attention_fwd.1} parent=11 // pred_region
          %s239 = ssub.s32 4096, 4096
          %240 = vsyncadd [#allocation10], %s239
          %s241 = sshll.u32 [#allocation9], 4
          %s242 = int_to_ptr.vmem [resolvable:$true] %s241
          %247 = dma.hbm_to_vmem [thread:$0]  %s4, 4096, %s242, [#allocation10], 256, 256, 16
        $region24: #{self_attention_fwd.1} parent=11 // pred_fallthru
          _
        // Predicated region
        $region25: #{self_attention_fwd.1} parent=11 // pred_check
          %p248 = pneg %p176
        $region26: #{self_attention_fwd.1} parent=11 // pred_check_branch
          %250 = sbr.rel (%p248) target = $region28
        $region27: #{self_attention_fwd.1} parent=11 // pred_region
          _
        $region28: #{self_attention_fwd.1} parent=11 // pred_fallthru
          _
      $region12: #{self_attention_fwd.1} parent=5 // pred_fallthru
        _
      %p251 = scmp.lt.s32.totalorder %s17, 2
      // Predicated region
      $region29: #{self_attention_fwd.1} parent=5 // pred_check
        %p252 = pneg %p251
      $region30: #{self_attention_fwd.1} parent=5 // pred_check_branch
        %254 = sbr.rel (%p252) target = $region32
      $region31: #{self_attention_fwd.1} parent=5 // pred_region
        // Predicated region
        $region33: #{self_attention_fwd.1} parent=31 // pred_check
          %p255 = pneg %p58
        $region34: #{self_attention_fwd.1} parent=31 // pred_check_branch
          %257 = sbr.rel (%p255) target = $region36
        $region35: #{self_attention_fwd.1} parent=31 // pred_region
          %p258 = scmp.lt.s32.totalorder %s24, 1
          %s259 = scalar_select %p258, %s24, 1
          %p260 = scmp.lt.s32.totalorder %s25, 0
          %s261 = scalar_select %p260, %s25, 0
          %s262 = sadd.s32 %s261, %s259
          %s263 = smul.addr %s262, 8
          %s264 = scalar_lea.vmem %s0, %s263
        $region36: #{self_attention_fwd.1} parent=31 // pred_fallthru
          _
        // Predicated region
        $region37: #{self_attention_fwd.1} parent=31 // pred_check
          %p265 = pneg %p86
        $region38: #{self_attention_fwd.1} parent=31 // pred_check_branch
          %267 = sbr.rel (%p265) target = $region40
        $region39: #{self_attention_fwd.1} parent=31 // pred_region
          %p268 = scmp.lt.s32.totalorder %s24, 1
          %s269 = scalar_select %p268, %s24, 1
          %p270 = scmp.lt.s32.totalorder %s26, 0
          %s271 = scalar_select %p270, %s26, 0
          %s272 = sadd.s32 %s271, %s269
          %s273 = smul.addr %s272, 8
          %s274 = scalar_lea.vmem %s1, %s273
        $region40: #{self_attention_fwd.1} parent=31 // pred_fallthru
          _
      $region32: #{self_attention_fwd.1} parent=5 // pred_fallthru
        _
      %p275 = scmp.le.s32.totalorder 1, %s17
      %p276 = scmp.lt.s32.totalorder %s17, 3
      %p277 = pnand %p275, %p276
      %p278 = pneg %p277
      // Predicated region
      $region41: #{self_attention_fwd.1} parent=5 // pred_check
        _
      $region42: #{self_attention_fwd.1} parent=5 // pred_check_branch
        %280 = sbr.rel (%p277) target = $region44
      $region43: #{self_attention_fwd.1} parent=5 // pred_region
        %s281 = ssub.s32 %s17, 1
        // Predicated region
        $region45: #{self_attention_fwd.1} parent=43 // pred_check
          %p282 = pneg %p113
        $region46: #{self_attention_fwd.1} parent=43 // pred_check_branch
          %284 = sbr.rel (%p282) target = $region48
        $region47: #{self_attention_fwd.1} parent=43 // pred_region
          %285 = dma.done [#allocation7], 2048
        $region48: #{self_attention_fwd.1} parent=43 // pred_fallthru
          _
        // Predicated region
        $region49: #{self_attention_fwd.1} parent=43 // pred_check
          %p286 = pneg %p155
        $region50: #{self_attention_fwd.1} parent=43 // pred_check_branch
          %288 = sbr.rel (%p286) target = $region52
        $region51: #{self_attention_fwd.1} parent=43 // pred_region
          %289 = dma.done [#allocation10], 4096
        $region52: #{self_attention_fwd.1} parent=43 // pred_fallthru
          _
        %p290 = scmp.lt.s32.totalorder %s27, 1
        %s291 = scalar_select %p290, %s27, 1
        %p292 = scmp.lt.s32.totalorder %s28, 0
        %s293 = scalar_select %p292, %s28, 0
        %s294 = sadd.s32 %s293, %s291
        %s295 = smul.addr %s294, 8
        %s296 = scalar_lea.vmem %s0, %s295
        %p297 = pneg %p64
        %p298 = pneg %p61
        %p299 = scmp.lt.s32.totalorder %s27, 1
        %s300 = scalar_select %p299, %s27, 1
        %p301 = scmp.lt.s32.totalorder %s29, 0
        %s302 = scalar_select %p301, %s29, 0
        %s303 = sadd.s32 %s302, %s300
        %s304 = smul.addr %s303, 8
        %s305 = scalar_lea.vmem %s1, %s304
        %p306 = pneg %p92
        %p307 = pneg %p89
        %p308 = pneg %p113
        %p309 = pneg %p110
        %p310 = pneg %p134
        %p311 = pneg %p131
        %p312 = pneg %p155
        %p313 = pneg %p152
        %p314 = pneg %p176
        %p315 = pneg %p173
        %p316 = pneg %p204
        %p317 = pneg %p201
        %s318 = sand.u32 %s191, 1
        %s319 = scalar_lea.sflag [#allocation8], %s318
        %s320 = sand.u32 %s191, 1
        %s321 = smul.addr %s320, 8
        %s322 = scalar_lea.vmem [#allocation11], %s321
        %p323 = scmp.lt.s32.totalorder %s27, 1
        %s324 = scalar_select %p323, %s27, 1
        %p325 = scmp.lt.s32.totalorder %s28, 0
        %s326 = scalar_select %p325, %s28, 0
        %s327 = sadd.s32 %s326, %s324
        %s328 = smul.addr %s327, 8
        %s329 = scalar_lea.vmem %s0, %s328
        %p330 = scmp.lt.s32.totalorder %s27, 1
        %s331 = scalar_select %p330, %s27, 1
        %p332 = scmp.lt.s32.totalorder %s29, 0
        %s333 = scalar_select %p332, %s29, 0
        %s334 = sadd.s32 %s333, %s331
        %s335 = smul.addr %s334, 8
        %s336 = scalar_lea.vmem %s1, %s335
        %p337 = scmp.eq.s32.totalorder %s29, 0
        // Predicated region
        $region53: #{self_attention_fwd.1} parent=43 // pred_check
          %p338 = pneg %p337
        $region54: #{self_attention_fwd.1} parent=43 // pred_check_branch
          %340 = sbr.rel (%p338) target = $region56
        $region55: #{self_attention_fwd.1} parent=43 // pred_region
          %v341 = vld [vmem:[%s329] sm:$0xff]
          %v342 = vld [vmem:[#allocation6] sm:$0xff]
          %v343 = vld [vmem:[#allocation6 + $0x8] sm:$0xff]
          %v344 = vld [vmem:[#allocation6 + $0x10] sm:$0xff]
          %v345 = vld [vmem:[#allocation6 + $0x18] sm:$0xff]
          %v346 = vld [vmem:[#allocation6 + $0x20] sm:$0xff]
          %v347 = vld [vmem:[#allocation6 + $0x28] sm:$0xff]
          %v348 = vld [vmem:[#allocation6 + $0x30] sm:$0xff]
          %v349 = vld [vmem:[#allocation6 + $0x38] sm:$0xff]
          %v350 = vld [vmem:[#allocation6 + $0x40] sm:$0xff]
          %v351 = vld [vmem:[#allocation6 + $0x48] sm:$0xff]
          %v352 = vld [vmem:[#allocation6 + $0x50] sm:$0xff]
          %v353 = vld [vmem:[#allocation6 + $0x58] sm:$0xff]
          %v354 = vld [vmem:[#allocation6 + $0x60] sm:$0xff]
          %v355 = vld [vmem:[#allocation6 + $0x68] sm:$0xff]
          %v356 = vld [vmem:[#allocation6 + $0x70] sm:$0xff]
          %v357 = vld [vmem:[#allocation6 + $0x78] sm:$0xff]
          %v358 = vld [vmem:[%s3] sm:$0x1]
          %v360 = vlaneseq
          %v361 = vshrl.u32 %v360, 7
          %v362 = vsub.s32 0, %v361
          %v363 = vrot.slane %v358, %v362
          %365 = vmatprep.subr.mxu0 0.0
          %366 = vmatpush1.msra.mxu0 %v357
          %367 = vmatprep.subr.mxu0 0.0
          %368 = vmatpush1.msra.mxu0 %v356
          %369 = vmatprep.subr.mxu0 0.0
          %370 = vmatpush1.msra.mxu0 %v355
          %371 = vmatprep.subr.mxu0 0.0
          %372 = vmatpush1.msra.mxu0 %v354
          %373 = vmatprep.subr.mxu0 0.0
          %374 = vmatpush1.msra.mxu0 %v353
          %375 = vmatprep.subr.mxu0 0.0
          %376 = vmatpush1.msra.mxu0 %v352
          %377 = vmatprep.subr.mxu0 0.0
          %378 = vmatpush1.msra.mxu0 %v351
          %379 = vmatprep.subr.mxu0 0.0
          %380 = vmatpush1.msra.mxu0 %v350
          %381 = vmatprep.subr.mxu0 0.0
          %382 = vmatpush1.msra.mxu0 %v349
          %383 = vmatprep.subr.mxu0 0.0
          %384 = vmatpush1.msra.mxu0 %v348
          %385 = vmatprep.subr.mxu0 0.0
          %386 = vmatpush1.msra.mxu0 %v347
          %387 = vmatprep.subr.mxu0 0.0
          %388 = vmatpush1.msra.mxu0 %v346
          %389 = vmatprep.subr.mxu0 0.0
          %390 = vmatpush1.msra.mxu0 %v345
          %391 = vmatprep.subr.mxu0 0.0
          %392 = vmatpush1.msra.mxu0 %v344
          %393 = vmatprep.subr.mxu0 0.0
          %394 = vmatpush1.msra.mxu0 %v343
          %395 = vmatprep.subr.mxu0 0.0
          %396 = vmatpush1.msra.mxu0 %v342
          %397 = vmatprep.subr.mxu0 0.0
          %398 = vmatpush2.msra.mxu0 0.0
          %399 = vmatprep.subr.mxu0 0.0
          %400 = vmatpush2.msra.mxu0 0.0
          %401 = vmatprep.subr.mxu0 0.0
          %402 = vmatpush2.msra.mxu0 0.0
          %403 = vmatprep.subr.mxu0 0.0
          %404 = vmatpush2.msra.mxu0 0.0
          %405 = vmatprep.subr.mxu0 0.0
          %406 = vmatpush2.msra.mxu0 0.0
          %407 = vmatprep.subr.mxu0 0.0
          %408 = vmatpush2.msra.mxu0 0.0
          %409 = vmatprep.subr.mxu0 0.0
          %410 = vmatpush2.msra.mxu0 0.0
          %411 = vmatprep.subr.mxu0 0.0
          %412 = vmatpush2.msra.mxu0 0.0
          %413 = vmatprep.subr.mxu0 0.0
          %414 = vmatpush2.msra.mxu0 0.0
          %415 = vmatprep.subr.mxu0 0.0
          %416 = vmatpush2.msra.mxu0 0.0
          %417 = vmatprep.subr.mxu0 0.0
          %418 = vmatpush2.msra.mxu0 0.0
          %419 = vmatprep.subr.mxu0 0.0
          %420 = vmatpush2.msra.mxu0 0.0
          %421 = vmatprep.subr.mxu0 0.0
          %422 = vmatpush2.msra.mxu0 0.0
          %423 = vmatprep.subr.mxu0 0.0
          %424 = vmatpush2.msra.mxu0 0.0
          %425 = vmatprep.subr.mxu0 0.0
          %426 = vmatpush2.msra.mxu0 0.0
          %427 = vmatprep.subr.mxu0 0.0
          %428 = vmatpush2.msra.mxu0 0.0
          %429 = vmatprep.mubr.f32.mxu0 0.0
          %430 = vmatmul.mubr.f32.gmra.mxu0 %v341
          %v431 = vpop.f32.mrf.mxu0
          %v432 = vadd.f32 %v363, %v431
          %v433 = vpop.f32.mrf.mxu0
          %434 = vdwg.mxu0
          %435 = vst [vmem:[#allocation2] sm:$0xff] %v432
          %436 = vst [vmem:[#allocation3] sm:$0xff] -inf
          %437 = vst [vmem:[#allocation4] sm:$0xff] 0.0
          %438 = vst [vmem:[#allocation5] sm:$0xff] 0.0
        $region56: #{self_attention_fwd.1} parent=43 // pred_fallthru
          _
        %v439 = vld [vmem:[%s336] sm:$0xff]
        %v440 = vld [vmem:[#allocation9] sm:$0xff]
        %v441 = vld [vmem:[#allocation9 + $0x8] sm:$0xff]
        %v442 = vld [vmem:[#allocation9 + $0x10] sm:$0xff]
        %v443 = vld [vmem:[#allocation9 + $0x18] sm:$0xff]
        %v444 = vld [vmem:[#allocation9 + $0x20] sm:$0xff]
        %v445 = vld [vmem:[#allocation9 + $0x28] sm:$0xff]
        %v446 = vld [vmem:[#allocation9 + $0x30] sm:$0xff]
        %v447 = vld [vmem:[#allocation9 + $0x38] sm:$0xff]
        %v448 = vld [vmem:[#allocation9 + $0x40] sm:$0xff]
        %v449 = vld [vmem:[#allocation9 + $0x48] sm:$0xff]
        %v450 = vld [vmem:[#allocation9 + $0x50] sm:$0xff]
        %v451 = vld [vmem:[#allocation9 + $0x58] sm:$0xff]
        %v452 = vld [vmem:[#allocation9 + $0x60] sm:$0xff]
        %v453 = vld [vmem:[#allocation9 + $0x68] sm:$0xff]
        %v454 = vld [vmem:[#allocation9 + $0x70] sm:$0xff]
        %v455 = vld [vmem:[#allocation9 + $0x78] sm:$0xff]
        %v456 = vld [vmem:[#allocation9 + $0x80] sm:$0xff]
        %v457 = vld [vmem:[#allocation9 + $0x88] sm:$0xff]
        %v458 = vld [vmem:[#allocation9 + $0x90] sm:$0xff]
        %v459 = vld [vmem:[#allocation9 + $0x98] sm:$0xff]
        %v460 = vld [vmem:[#allocation9 + $0xa0] sm:$0xff]
        %v461 = vld [vmem:[#allocation9 + $0xa8] sm:$0xff]
        %v462 = vld [vmem:[#allocation9 + $0xb0] sm:$0xff]
        %v463 = vld [vmem:[#allocation9 + $0xb8] sm:$0xff]
        %v464 = vld [vmem:[#allocation9 + $0xc0] sm:$0xff]
        %v465 = vld [vmem:[#allocation9 + $0xc8] sm:$0xff]
        %v466 = vld [vmem:[#allocation9 + $0xd0] sm:$0xff]
        %v467 = vld [vmem:[#allocation9 + $0xd8] sm:$0xff]
        %v468 = vld [vmem:[#allocation9 + $0xe0] sm:$0xff]
        %v469 = vld [vmem:[#allocation9 + $0xe8] sm:$0xff]
        %v470 = vld [vmem:[#allocation9 + $0xf0] sm:$0xff]
        %v471 = vld [vmem:[#allocation9 + $0xf8] sm:$0xff]
        %v472 = vld [vmem:[%s5] sm:$0x3]
        %v474 = vlaneseq
        %v475 = vshrl.u32 %v474, 7
        %v476 = vsub.s32 0, %v475
        %v477 = vrot.slane %v472, %v476
        %v478 = vlaneseq
        %v479 = vshrl.u32 %v478, 7
        %v480 = vsub.s32 1, %v479
        %v481 = vrot.slane %v472, %v480
        %484 = vmatprep.subr.mxu0 %v471
        %485 = vmatpush1.msra.mxu0 %v470
        %486 = vmatprep.subr.mxu0 %v469
        %487 = vmatpush1.msra.mxu0 %v468
        %488 = vmatprep.subr.mxu0 %v467
        %489 = vmatpush1.msra.mxu0 %v466
        %490 = vmatprep.subr.mxu0 %v465
        %491 = vmatpush1.msra.mxu0 %v464
        %492 = vmatprep.subr.mxu0 %v463
        %493 = vmatpush1.msra.mxu0 %v462
        %494 = vmatprep.subr.mxu0 %v461
        %495 = vmatpush1.msra.mxu0 %v460
        %496 = vmatprep.subr.mxu0 %v459
        %497 = vmatpush1.msra.mxu0 %v458
        %498 = vmatprep.subr.mxu0 %v457
        %499 = vmatpush1.msra.mxu0 %v456
        %500 = vmatprep.subr.mxu0 %v455
        %501 = vmatpush1.msra.mxu0 %v454
        %502 = vmatprep.subr.mxu0 %v453
        %503 = vmatpush1.msra.mxu0 %v452
        %504 = vmatprep.subr.mxu0 %v451
        %505 = vmatpush1.msra.mxu0 %v450
        %506 = vmatprep.subr.mxu0 %v449
        %507 = vmatpush1.msra.mxu0 %v448
        %508 = vmatprep.subr.mxu0 %v447
        %509 = vmatpush1.msra.mxu0 %v446
        %510 = vmatprep.subr.mxu0 %v445
        %511 = vmatpush1.msra.mxu0 %v444
        %512 = vmatprep.subr.mxu0 %v443
        %513 = vmatpush1.msra.mxu0 %v442
        %514 = vmatprep.subr.mxu0 %v441
        %515 = vmatpush1.msra.mxu0 %v440
        %516 = vmatprep.subr.mxu0 0.0
        %517 = vmatpush2.msra.mxu0 0.0
        %518 = vmatprep.subr.mxu0 0.0
        %519 = vmatpush2.msra.mxu0 0.0
        %520 = vmatprep.subr.mxu0 0.0
        %521 = vmatpush2.msra.mxu0 0.0
        %522 = vmatprep.subr.mxu0 0.0
        %523 = vmatpush2.msra.mxu0 0.0
        %524 = vmatprep.subr.mxu0 0.0
        %525 = vmatpush2.msra.mxu0 0.0
        %526 = vmatprep.subr.mxu0 0.0
        %527 = vmatpush2.msra.mxu0 0.0
        %528 = vmatprep.subr.mxu0 0.0
        %529 = vmatpush2.msra.mxu0 0.0
        %530 = vmatprep.subr.mxu0 0.0
        %531 = vmatpush2.msra.mxu0 0.0
        %532 = vmatprep.subr.mxu0 0.0
        %533 = vmatpush2.msra.mxu0 0.0
        %534 = vmatprep.subr.mxu0 0.0
        %535 = vmatpush2.msra.mxu0 0.0
        %536 = vmatprep.subr.mxu0 0.0
        %537 = vmatpush2.msra.mxu0 0.0
        %538 = vmatprep.subr.mxu0 0.0
        %539 = vmatpush2.msra.mxu0 0.0
        %540 = vmatprep.subr.mxu0 0.0
        %541 = vmatpush2.msra.mxu0 0.0
        %542 = vmatprep.subr.mxu0 0.0
        %543 = vmatpush2.msra.mxu0 0.0
        %544 = vmatprep.subr.mxu0 0.0
        %545 = vmatpush2.msra.mxu0 0.0
        %546 = vmatprep.subr.mxu0 0.0
        %547 = vmatpush2.msra.mxu0 0.0
        %548 = vmatprep.mubr.f32.mxu0 0.0
        %549 = vmatmul.mubr.f32.gmra.mxu0 %v439
        %v550 = vpop.f32.mrf.mxu0
        %v551 = vadd.f32 %v477, %v550
        %v552 = vpop.f32.mrf.mxu0
        %v553 = vadd.f32 %v481, %v552
        %554 = vdwg.mxu0
        %v555 = vld [vmem:[#allocation2] sm:$0xff]
        %556 = vmatprep.subr.mxu0 0.0
        %557 = vmatpush1.xpose.msra.mxu0 0.0
        %558 = vmatprep.subr.mxu0 0.0
        %559 = vmatpush1.xpose.msra.mxu0 0.0
        %560 = vmatprep.subr.mxu0 0.0
        %561 = vmatpush1.xpose.msra.mxu0 0.0
        %562 = vmatprep.subr.mxu0 0.0
        %563 = vmatpush1.xpose.msra.mxu0 0.0
        %564 = vmatprep.subr.mxu0 0.0
        %565 = vmatpush1.xpose.msra.mxu0 0.0
        %566 = vmatprep.subr.mxu0 0.0
        %567 = vmatpush1.xpose.msra.mxu0 0.0
        %568 = vmatprep.subr.mxu0 0.0
        %569 = vmatpush1.xpose.msra.mxu0 0.0
        %570 = vmatprep.subr.mxu0 0.0
        %571 = vmatpush1.xpose.msra.mxu0 0.0
        %572 = vmatprep.subr.mxu0 0.0
        %573 = vmatpush1.xpose.msra.mxu0 0.0
        %574 = vmatprep.subr.mxu0 0.0
        %575 = vmatpush1.xpose.msra.mxu0 0.0
        %576 = vmatprep.subr.mxu0 0.0
        %577 = vmatpush1.xpose.msra.mxu0 0.0
        %578 = vmatprep.subr.mxu0 0.0
        %579 = vmatpush1.xpose.msra.mxu0 0.0
        %580 = vmatprep.subr.mxu0 0.0
        %581 = vmatpush1.xpose.msra.mxu0 0.0
        %582 = vmatprep.subr.mxu0 0.0
        %583 = vmatpush1.xpose.msra.mxu0 0.0
        %584 = vmatprep.subr.mxu0 0.0
        %585 = vmatpush1.xpose.msra.mxu0 0.0
        %586 = vmatprep.subr.mxu0 0.0
        %587 = vmatpush1.xpose.msra.mxu0 %v551
        %588 = vmatprep.subr.mxu0 0.0
        %589 = vmatpush2.xpose.msra.mxu0 0.0
        %590 = vmatprep.subr.mxu0 0.0
        %591 = vmatpush2.xpose.msra.mxu0 0.0
        %592 = vmatprep.subr.mxu0 0.0
        %593 = vmatpush2.xpose.msra.mxu0 0.0
        %594 = vmatprep.subr.mxu0 0.0
        %595 = vmatpush2.xpose.msra.mxu0 0.0
        %596 = vmatprep.subr.mxu0 0.0
        %597 = vmatpush2.xpose.msra.mxu0 0.0
        %598 = vmatprep.subr.mxu0 0.0
        %599 = vmatpush2.xpose.msra.mxu0 0.0
        %600 = vmatprep.subr.mxu0 0.0
        %601 = vmatpush2.xpose.msra.mxu0 0.0
        %602 = vmatprep.subr.mxu0 0.0
        %603 = vmatpush2.xpose.msra.mxu0 0.0
        %604 = vmatprep.subr.mxu0 0.0
        %605 = vmatpush2.xpose.msra.mxu0 0.0
        %606 = vmatprep.subr.mxu0 0.0
        %607 = vmatpush2.xpose.msra.mxu0 0.0
        %608 = vmatprep.subr.mxu0 0.0
        %609 = vmatpush2.xpose.msra.mxu0 0.0
        %610 = vmatprep.subr.mxu0 0.0
        %611 = vmatpush2.xpose.msra.mxu0 0.0
        %612 = vmatprep.subr.mxu0 0.0
        %613 = vmatpush2.xpose.msra.mxu0 0.0
        %614 = vmatprep.subr.mxu0 0.0
        %615 = vmatpush2.xpose.msra.mxu0 0.0
        %616 = vmatprep.subr.mxu0 0.0
        %617 = vmatpush2.xpose.msra.mxu0 0.0
        %618 = vmatprep.subr.mxu0 0.0
        %619 = vmatpush2.xpose.msra.mxu0 0.0
        %620 = vmatprep.mubr.f32.mxu0 0.0
        %621 = vmatmul.mubr.f32.gmra.mxu0 %v555
        %v622 = vpop.f32.mrf.mxu0
        %v623 = vadd.f32 0.0, %v622
        %v624 = vpop.f32.mrf.mxu0
        %625 = vdwg.mxu0
        %v626 = vld [vmem:[#allocation3] sm:$0xff]
        %vm627 = vcmask 64512
        %v628 = vsel %vm627, %v623, -inf
        %629 = vmax.xlane.f32.xlu0 %v628
        %v630 = vpop.xlane.xlu0 %629
        %v631 = vmax.f32 %v626, %v630
        %v632 = vsub.f32 %v626, %v631
        %v633 = vmul.f32 %v632, 1.442695
        %v634 = vpow.pop %v633
        %v635 = vsub.f32 %v623, %v631
        %v636 = vmul.f32 %v635, 1.442695
        %v637 = vpow.pop %v636
        %v638 = vld [vmem:[#allocation4] sm:$0xff]
        %v639 = vmul.f32 %v634, %v638
        %v640 = vsel %vm627, %v637, 0.0
        %641 = vadd.xlane.f32.xlu0 %v640
        %v642 = vpop.xlane.xlu0 %641
        %v643 = vadd.f32 %v639, %v642
        %644 = vst [vmem:[#allocation4] sm:$0xff] %v643
        %v645 = vld [vmem:[#allocation5] sm:$0xff]
        %v646 = vmul.f32 %v634, %v645
        %v648 = vsel %vm627, %v637, 0
        %650 = vmatprep.subr.mxu0 0.0
        %651 = vmatpush1.msra.mxu0 0.0
        %652 = vmatprep.subr.mxu0 0.0
        %653 = vmatpush1.msra.mxu0 0.0
        %654 = vmatprep.subr.mxu0 0.0
        %655 = vmatpush1.msra.mxu0 0.0
        %656 = vmatprep.subr.mxu0 0.0
        %657 = vmatpush1.msra.mxu0 0.0
        %658 = vmatprep.subr.mxu0 0.0
        %659 = vmatpush1.msra.mxu0 0.0
        %660 = vmatprep.subr.mxu0 0.0
        %661 = vmatpush1.msra.mxu0 0.0
        %662 = vmatprep.subr.mxu0 0.0
        %663 = vmatpush1.msra.mxu0 0.0
        %664 = vmatprep.subr.mxu0 0.0
        %665 = vmatpush1.msra.mxu0 0.0
        %666 = vmatprep.subr.mxu0 0.0
        %667 = vmatpush1.msra.mxu0 0.0
        %668 = vmatprep.subr.mxu0 0.0
        %669 = vmatpush1.msra.mxu0 0.0
        %670 = vmatprep.subr.mxu0 0.0
        %671 = vmatpush1.msra.mxu0 0.0
        %672 = vmatprep.subr.mxu0 0.0
        %673 = vmatpush1.msra.mxu0 0.0
        %674 = vmatprep.subr.mxu0 0.0
        %675 = vmatpush1.msra.mxu0 0.0
        %676 = vmatprep.subr.mxu0 0.0
        %677 = vmatpush1.msra.mxu0 0.0
        %678 = vmatprep.subr.mxu0 0.0
        %679 = vmatpush1.msra.mxu0 0.0
        %680 = vmatprep.subr.mxu0 0.0
        %681 = vmatpush1.msra.mxu0 %v553
        %682 = vmatprep.subr.mxu0 0.0
        %683 = vmatpush2.msra.mxu0 0.0
        %684 = vmatprep.subr.mxu0 0.0
        %685 = vmatpush2.msra.mxu0 0.0
        %686 = vmatprep.subr.mxu0 0.0
        %687 = vmatpush2.msra.mxu0 0.0
        %688 = vmatprep.subr.mxu0 0.0
        %689 = vmatpush2.msra.mxu0 0.0
        %690 = vmatprep.subr.mxu0 0.0
        %691 = vmatpush2.msra.mxu0 0.0
        %692 = vmatprep.subr.mxu0 0.0
        %693 = vmatpush2.msra.mxu0 0.0
        %694 = vmatprep.subr.mxu0 0.0
        %695 = vmatpush2.msra.mxu0 0.0
        %696 = vmatprep.subr.mxu0 0.0
        %697 = vmatpush2.msra.mxu0 0.0
        %698 = vmatprep.subr.mxu0 0.0
        %699 = vmatpush2.msra.mxu0 0.0
        %700 = vmatprep.subr.mxu0 0.0
        %701 = vmatpush2.msra.mxu0 0.0
        %702 = vmatprep.subr.mxu0 0.0
        %703 = vmatpush2.msra.mxu0 0.0
        %704 = vmatprep.subr.mxu0 0.0
        %705 = vmatpush2.msra.mxu0 0.0
        %706 = vmatprep.subr.mxu0 0.0
        %707 = vmatpush2.msra.mxu0 0.0
        %708 = vmatprep.subr.mxu0 0.0
        %709 = vmatpush2.msra.mxu0 0.0
        %710 = vmatprep.subr.mxu0 0.0
        %711 = vmatpush2.msra.mxu0 0.0
        %712 = vmatprep.subr.mxu0 0.0
        %713 = vmatpush2.msra.mxu0 0.0
        %714 = vmatprep.mubr.f32.mxu0 0.0
        %715 = vmatmul.mubr.f32.gmra.mxu0 %v648
        %v716 = vpop.f32.mrf.mxu0
        %v717 = vadd.f32 0.0, %v716
        %v718 = vpop.f32.mrf.mxu0
        %719 = vdwg.mxu0
        %v720 = vadd.f32 %v646, %v717
        %721 = vst [vmem:[#allocation5] sm:$0xff] %v720
        %722 = vst [vmem:[#allocation3] sm:$0xff] %v631
        // Predicated region
        $region57: #{self_attention_fwd.1} parent=43 // pred_check
          %p723 = pneg %p337
        $region58: #{self_attention_fwd.1} parent=43 // pred_check_branch
          %725 = sbr.rel (%p723) target = $region60
        $region59: #{self_attention_fwd.1} parent=43 // pred_region
          %v726 = vld [vmem:[#allocation4] sm:$0xff]
          %v727 = vrcp.pop %v726
          %v728 = vld [vmem:[#allocation5] sm:$0xff]
          %v729 = vmul.f32 %v728, %v727
          %730 = vst [vmem:[%s322] sm:$0xff] %v729
        $region60: #{self_attention_fwd.1} parent=43 // pred_fallthru
          _
        %s731 = sand.u32 %s191, 1
        %s732 = scalar_lea.sflag [#allocation8], %s731
        %s733 = sand.u32 %s191, 1
        %s734 = smul.addr %s733, 8
        %s735 = scalar_lea.vmem [#allocation11], %s734
        // Predicated region
        $region61: #{self_attention_fwd.1} parent=43 // pred_check
          %p736 = pneg %p201
        $region62: #{self_attention_fwd.1} parent=43 // pred_check_branch
          %738 = sbr.rel (%p736) target = $region64
        $region63: #{self_attention_fwd.1} parent=43 // pred_region
          %s740 = ssub.s32 128, 128
          %741 = vsyncadd %s732, %s740
          %s742 = sadd.s32 %s28, %s27
          %s743 = smul.addr %s742, 128
          %s744 = scalar_lea.hbm %s6, %s743
          %s746 = sshll.u32 %s735, 4
          %s747 = int_to_ptr.vmem [resolvable:$true] %s746
          %749 = dma.vmem_to_hbm [thread:$0]  %s747, 128, %s744, %s732
        $region64: #{self_attention_fwd.1} parent=43 // pred_fallthru
          _
      $region44: #{self_attention_fwd.1} parent=5 // pred_fallthru
        _
      %p750 = scmp.le.s32.totalorder 2, %s17
      // Predicated region
      $region65: #{self_attention_fwd.1} parent=5 // pred_check
        %p751 = pneg %p750
      $region66: #{self_attention_fwd.1} parent=5 // pred_check_branch
        %753 = sbr.rel (%p751) target = $region68
      $region67: #{self_attention_fwd.1} parent=5 // pred_region
        %s754 = ssub.s32 %s17, 2
        // Predicated region
        $region69: #{self_attention_fwd.1} parent=67 // pred_check
          %p755 = pneg %p207
        $region70: #{self_attention_fwd.1} parent=67 // pred_check_branch
          %757 = sbr.rel (%p755) target = $region72
        $region71: #{self_attention_fwd.1} parent=67 // pred_region
          %s758 = sand.u32 %s192, 1
          %s759 = scalar_lea.sflag [#allocation8], %s758
          %s760 = sand.u32 %s192, 1
          %s761 = smul.addr %s760, 8
          %s762 = scalar_lea.vmem [#allocation11], %s761
          %763 = dma.done %s759, 128
        $region72: #{self_attention_fwd.1} parent=67 // pred_fallthru
          _
      $region68: #{self_attention_fwd.1} parent=5 // pred_fallthru
        _
    $region6: #{self_attention_fwd.1} parent=1 // loop_footer
      %s21 = sadd.s32 1, %s17
    $region7: #{self_attention_fwd.1} parent=1 // loop_footer_branch
      %16 = sbr.rel target = $region3
    $region8: #{self_attention_fwd.1} parent=1 // loop_exit
      _
    %764 = vsyncpa [#allocation7], 1
    %s765 = scalar_lea.sflag [#allocation7], 1
    %766 = vsyncpa %s765, 1
    %767 = vsyncpa [#allocation10], 1
    %768 = vsyncpa [#allocation8], 1
    %s769 = scalar_lea.sflag [#allocation8], 1
    %770 = vsyncpa %s769, 1

</llo_original>
